<compile_context>
chip_gen: v5e
topology: v5e:2x2
jax: 0.10.0
libtpu: 0.0.40
codegen_flags: <defaults>
</compile_context>

<pallas_src>
import functools
import math

import jax
import jax.numpy as jnp
import numpy as np
from jax.experimental import pallas as pl
from jax.experimental.pallas import tpu as pltpu

# Model hyperparameters (mirror TransformerModel defaults)
VOCAB = 50                                   # vocab_size
VOCAB_PAD = -(-VOCAB // 128) * 128           # one-hot gather width (lane-dense)
EMB = 32                                     # emb_dim
NHEAD = 1                                    # nhead
FF = 512                                     # dim_feedforward
OUT = 1                                      # out_size
OUT_PAD = 128                                # lane-dense padded decoder width
VEC_W = FF                                   # packed bias/LN slab width
LN_EPS = 1e-5                                # nn.LayerNorm default eps
NEG_INF = -1e30                              # key-padding additive bias

# Row indices inside the packed `vecs` slab.
(_BQ, _BK, _BV, _BO, _LN1W, _LN1B, _B1, _B2, _LN2W, _LN2B, _BD) = range(11)
N_VEC = 11


def _layer_norm(x, w, b):
    mu = jnp.mean(x, axis=-1, keepdims=True)
    var = jnp.mean((x - mu) ** 2, axis=-1, keepdims=True)
    return (x - mu) * jax.lax.rsqrt(var + LN_EPS) * w + b


def _encoder_kernel(tok_ref, emb_ref, wq_ref, wk_ref, wv_ref, wo_ref,
                    w1_ref, w2_ref, wd_ref, vecs_ref, out_ref, *, approx_recip):
    """One sequence per grid step.

    K/V over all S tokens; Q, attention output, norms, FFN and decoder only on the
    last token (exactly equivalent for a single encoder layer + per-token decoder).
    """
    S = tok_ref.shape[-1]
    E = wq_ref.shape[0]
    VP = emb_ref.shape[0]
    cdt = wq_ref.dtype                      # MXU operand dtype (bf16 fast / f32 exact)

    tok = tok_ref[0]                        # (1, S) int32 token ids
    vecs = vecs_ref[...]                    # (N_VEC, VEC_W) f32 packed biases / LN params

    # ---- fused embedding gather: one-hot (S, VP) @ table (VP, E) on the MXU ------
    # Kept in f32 (one nonzero product per row -> exact); sqrt(vocab) pre-folded.
    onehot = (tok[:, :, None] ==
              jax.lax.broadcasted_iota(jnp.int32, (1, S, VP), 2)).astype(jnp.float32)
    x = jnp.dot(onehot.reshape(S, VP), emb_ref[...],
                preferred_element_type=jnp.float32)                       # (S, E)
    x_last = x[S - 1:S, :]                                                # (1, E)

    # ---- K/V over all tokens, Q only for the last token (1/sqrt(hd) folded in) ---
    k = jnp.dot(x.astype(cdt), wk_ref[...],
                preferred_element_type=jnp.float32) + vecs[_BK:_BK + 1, :E]
    v = jnp.dot(x.astype(cdt), wv_ref[...],
                preferred_element_type=jnp.float32) + vecs[_BV:_BV + 1, :E]
    q = jnp.dot(x_last.astype(cdt), wq_ref[...],
                preferred_element_type=jnp.float32) + vecs[_BQ:_BQ + 1, :E]

    # ---- (1, S) scores; key-padding bias built in-kernel, added in f32 -----------
    s = jnp.dot(q.astype(cdt), k.astype(cdt).T, preferred_element_type=jnp.float32)
    s = s + jnp.where(tok == 0, jnp.float32(NEG_INF), jnp.float32(0.0))
    m = jnp.max(s, axis=-1, keepdims=True)
    p = jnp.exp(s - m)                                                    # f32 softmax
    p = p * pl.reciprocal(jnp.sum(p, axis=-1, keepdims=True), approx=approx_recip)
    # NOTE: an all-padding sequence degrades to uniform attention instead of
    # PyTorch's NaN behavior (same caveat as before).

    attn = jnp.dot(p.astype(cdt), v.astype(cdt), preferred_element_type=jnp.float32)
    attn = jnp.dot(attn.astype(cdt), wo_ref[...],
                   preferred_element_type=jnp.float32) + vecs[_BO:_BO + 1, :E]

    # TODO(synk): dropout layers are identity (inference semantics).
    h = _layer_norm(x_last + attn,
                    vecs[_LN1W:_LN1W + 1, :E], vecs[_LN1B:_LN1B + 1, :E])  # norm1

    # ---- FFN + norm2 + decoder on the single last-token row ----------------------
    ff = jnp.dot(h.astype(cdt), w1_ref[...],
                 preferred_element_type=jnp.float32) + vecs[_B1:_B1 + 1, :]
    ff = jnp.maximum(ff, 0.0)
    ff = jnp.dot(ff.astype(cdt), w2_ref[...],
                 preferred_element_type=jnp.float32) + vecs[_B2:_B2 + 1, :E]
    y = _layer_norm(h + ff,
                    vecs[_LN2W:_LN2W + 1, :E], vecs[_LN2B:_LN2B + 1, :E])  # norm2

    dec = jnp.dot(y.astype(cdt), wd_ref[...],
                  preferred_element_type=jnp.float32) + vecs[_BD:_BD + 1, :OUT_PAD]
    out_ref[...] = dec.reshape(out_ref.shape)           # (1, 1, OUT_PAD) lane-dense store


def _pack_params(P, mxu_dtype):
    """Fold constants into weights, cast MXU operands, pack vectors into one slab."""
    sc = jnp.float32(1.0 / math.sqrt(EMB // NHEAD))

    # Embedding table stays f32 (exact gather); sqrt(vocab) folded; vocab padded.
    emb = jnp.zeros((VOCAB_PAD, EMB), jnp.float32)
    emb = emb.at[:VOCAB, :].set(P["embedding"] * jnp.float32(math.sqrt(VOCAB)))

    wq = (P["wq"] * sc).astype(mxu_dtype)
    wk = P["wk"].astype(mxu_dtype)
    wv = P["wv"].astype(mxu_dtype)
    wo = P["wo"].astype(mxu_dtype)
    w1 = P["w1"].astype(mxu_dtype)
    w2 = P["w2"].astype(mxu_dtype)
    wd = jnp.zeros((EMB, OUT_PAD), jnp.float32).at[:, :OUT].set(P["wd"]).astype(mxu_dtype)

    def row(v):
        v = v.reshape(-1)
        return jnp.zeros((VEC_W,), jnp.float32).at[:v.shape[0]].set(v)

    vecs = jnp.stack([
        row(P["bq"] * sc), row(P["bk"]), row(P["bv"]), row(P["bo"]),
        row(P["ln1w"]), row(P["ln1b"]),
        row(P["b1"]), row(P["b2"]),
        row(P["ln2w"]), row(P["ln2b"]),
        row(P["bd"]),
    ])                                                   # (N_VEC, VEC_W) f32

    return emb, wq, wk, wv, wo, w1, w2, wd, vecs


def transformer_forward(tokens, P, *, mxu_dtype=jnp.bfloat16):
    """Pallas equivalent of TransformerModel.forward(input).

    mxu_dtype=jnp.bfloat16: fast v6e/v7x config (bf16 MXU operands, f32 accumulation,
    f32 softmax/LayerNorm, EUP approx reciprocal).  jnp.float32: exact-parity config.
    """
    B, S = tokens.shape
    approx = mxu_dtype != jnp.float32
    emb, wq, wk, wv, wo, w1, w2, wd, vecs = _pack_params(P, mxu_dtype)
    tok3 = tokens.astype(jnp.int32).reshape(B, 1, S)

    const = lambda b: (0, 0)   # weights / table: VMEM-resident across the whole grid

    out = pl.pallas_call(
        functools.partial(_encoder_kernel, approx_recip=approx),
        out_shape=jax.ShapeDtypeStruct((B, 1, OUT_PAD), jnp.float32),
        grid_spec=pltpu.PrefetchScalarGridSpec(
            num_scalar_prefetch=0,
            grid=(B,),                                   # one sequence per step
            in_specs=[
                pl.BlockSpec((1, 1, S), lambda b: (b, 0, 0)),   # token ids
                pl.BlockSpec((VOCAB_PAD, EMB), const),          # embedding table (f32)
                pl.BlockSpec((EMB, EMB), const),                # wq (scaled)
                pl.BlockSpec((EMB, EMB), const),                # wk
                pl.BlockSpec((EMB, EMB), const),                # wv
                pl.BlockSpec((EMB, EMB), const),                # wo
                pl.BlockSpec((EMB, FF), const),                 # w1
                pl.BlockSpec((FF, EMB), const),                 # w2
                pl.BlockSpec((EMB, OUT_PAD), const),            # wd (lane-padded)
                pl.BlockSpec((N_VEC, VEC_W), const),            # packed biases / LN
            ],
            out_specs=pl.BlockSpec((1, 1, OUT_PAD), lambda b: (b, 0, 0)),
        ),
        compiler_params=pltpu.CompilerParams(
            # Batch axis is embarrassingly parallel (disjoint output rows, no
            # accumulators) -> shards across both TensorCores on v7x.
            dimension_semantics=("parallel",)),
    )(tok3, emb, wq, wk, wv, wo, w1, w2, wd, vecs)

    return out[:, 0, :OUT]                               # decoder(...)[:, -1]


def reference_forward(tokens, P):
    """Pure-JAX f32 reference (same math as the PyTorch module) for verification."""
    emb = P["embedding"][tokens] * math.sqrt(VOCAB)
    kbias = jnp.where(tokens == 0, NEG_INF, 0.0)[:, None, :]
    q = emb @ P["wq"] + P["bq"]
    k = emb @ P["wk"] + P["bk"]
    v = emb @ P["wv"] + P["bv"]
    s = jnp.einsum("bqd,bkd->bqk", q, k) / math.sqrt(EMB // NHEAD) + kbias
    p = jax.nn.softmax(s, axis=-1)
    attn = jnp.einsum("bqk,bkd->bqd", p, v) @ P["wo"] + P["bo"]
    h = _layer_norm(emb + attn, P["ln1w"], P["ln1b"])
    ff = jax.nn.relu(h @ P["w1"] + P["b1"]) @ P["w2"] + P["b2"]
    y = _layer_norm(h + ff, P["ln2w"], P["ln2b"])
    return (y @ P["wd"] + P["bd"])[:, -1, :]


def init_params(key):
    """Deterministic synthetic init (shapes match the PyTorch module)."""
    ks = jax.random.split(key, 8)

    def u(k, shape, r=0.1):
        return jax.random.uniform(k, shape, jnp.float32, -r, r)

    return dict(
        embedding=u(ks[0], (VOCAB, EMB)),                  # uniform_(-0.1, 0.1)
        wq=u(ks[1], (EMB, EMB)), bq=jnp.zeros((1, EMB), jnp.float32),
        wk=u(ks[2], (EMB, EMB)), bk=jnp.zeros((1, EMB), jnp.float32),
        wv=u(ks[3], (EMB, EMB)), bv=jnp.zeros((1, EMB), jnp.float32),
        wo=u(ks[4], (EMB, EMB)), bo=jnp.zeros((1, EMB), jnp.float32),
        ln1w=jnp.ones((1, EMB), jnp.float32), ln1b=jnp.zeros((1, EMB), jnp.float32),
        w1=u(ks[5], (EMB, FF)), b1=jnp.zeros((1, FF), jnp.float32),
        w2=u(ks[6], (FF, EMB)), b2=jnp.zeros((1, EMB), jnp.float32),
        ln2w=jnp.ones((1, EMB), jnp.float32), ln2b=jnp.zeros((1, EMB), jnp.float32),
        wd=u(ks[7], (EMB, OUT)), bd=jnp.zeros((1, OUT), jnp.float32),
    )


if __name__ == "__main__":
    key = jax.random.PRNGKey(0)
    pkey, tkey = jax.random.split(key)
    params = init_params(pkey)

    B, S = 2, 8
    tokens = jax.random.randint(tkey, (B, S), 0, VOCAB, dtype=jnp.int32)  # 0 == padding id

    ref = reference_forward(tokens, params)

    # Exact-parity config: f32 MXU operands + exact reciprocal.
    out_f32 = jax.block_until_ready(transformer_forward(tokens, params, mxu_dtype=jnp.float32))
    assert out_f32.shape == (B, OUT)
    np.testing.assert_allclose(np.asarray(out_f32), np.asarray(ref), rtol=5e-4, atol=5e-4)

    # Fast config: bf16 MXU operands (f32 accumulate / softmax / LayerNorm) + approx recip.
    out_bf16 = jax.block_until_ready(transformer_forward(tokens, params, mxu_dtype=jnp.bfloat16))
    assert out_bf16.shape == (B, OUT)
    np.testing.assert_allclose(np.asarray(out_bf16), np.asarray(ref), rtol=5e-2, atol=5e-2)

    print("KERNEL_OK")
</pallas_src>

<mosaic_0001>
module attributes {stable_mosaic.version = 11 : i64} {
  func.func @_encoder_kernel(%arg0: i32, %arg1: memref<1x1x8xi32, #tpu.memory_space<vmem>>, %arg2: memref<128x32xf32, #tpu.memory_space<vmem>>, %arg3: memref<32x32xf32, #tpu.memory_space<vmem>>, %arg4: memref<32x32xf32, #tpu.memory_space<vmem>>, %arg5: memref<32x32xf32, #tpu.memory_space<vmem>>, %arg6: memref<32x32xf32, #tpu.memory_space<vmem>>, %arg7: memref<32x512xf32, #tpu.memory_space<vmem>>, %arg8: memref<512x32xf32, #tpu.memory_space<vmem>>, %arg9: memref<32x128xf32, #tpu.memory_space<vmem>>, %arg10: memref<11x512xf32, #tpu.memory_space<vmem>>, %arg11: memref<1x1x128xf32, #tpu.memory_space<vmem>>) attributes {dimension_semantics = [#tpu.dimension_semantics<parallel>], iteration_bounds = array<i64: 2>, scalar_prefetch = 0 : i64, scratch_operands = 0 : i64, tpu.core_type = #tpu.core_type<tc>, window_params = [{transform_indices = @transform_0, window_bounds = array<i64: 1, 1, 8>}, {pipeline_mode = #tpu.pipeline_mode<synchronous>, transform_indices = @transform_1, window_bounds = array<i64: 128, 32>}, {pipeline_mode = #tpu.pipeline_mode<synchronous>, transform_indices = @transform_2, window_bounds = array<i64: 32, 32>}, {pipeline_mode = #tpu.pipeline_mode<synchronous>, transform_indices = @transform_3, window_bounds = array<i64: 32, 32>}, {pipeline_mode = #tpu.pipeline_mode<synchronous>, transform_indices = @transform_4, window_bounds = array<i64: 32, 32>}, {pipeline_mode = #tpu.pipeline_mode<synchronous>, transform_indices = @transform_5, window_bounds = array<i64: 32, 32>}, {pipeline_mode = #tpu.pipeline_mode<synchronous>, transform_indices = @transform_6, window_bounds = array<i64: 32, 512>}, {pipeline_mode = #tpu.pipeline_mode<synchronous>, transform_indices = @transform_7, window_bounds = array<i64: 512, 32>}, {pipeline_mode = #tpu.pipeline_mode<synchronous>, transform_indices = @transform_8, window_bounds = array<i64: 32, 128>}, {pipeline_mode = #tpu.pipeline_mode<synchronous>, transform_indices = @transform_9, window_bounds = array<i64: 11, 512>}, {transform_indices = @transform_10, window_bounds = array<i64: 1, 1, 128>}]} {
    %c0 = arith.constant 0 : index
    %c0_0 = arith.constant 0 : index
    %c0_1 = arith.constant 0 : index
    %0 = vector.load %arg1[%c0, %c0_0, %c0_1] : memref<1x1x8xi32, #tpu.memory_space<vmem>>, vector<1x1x8xi32>
    %1 = vector.shape_cast %0 : vector<1x1x8xi32> to vector<1x8xi32>
    %c0_2 = arith.constant 0 : index
    %c0_3 = arith.constant 0 : index
    %2 = vector.load %arg10[%c0_2, %c0_3] : memref<11x512xf32, #tpu.memory_space<vmem>>, vector<11x512xf32>
    %3 = vector.shape_cast %1 : vector<1x8xi32> to vector<1x8x1xi32>
    %4 = tpu.iota {dimensions = array<i32: 2>} : vector<1x8x128xi32>
    %5 = vector.broadcast %3 : vector<1x8x1xi32> to vector<1x8x128xi32>
    %6 = arith.cmpi eq, %5, %4 : vector<1x8x128xi32>
    %7 = arith.extui %6 : vector<1x8x128xi1> to vector<1x8x128xi32>
    %8 = arith.sitofp %7 : vector<1x8x128xi32> to vector<1x8x128xf32>
    %9 = vector.shape_cast %8 : vector<1x8x128xf32> to vector<8x128xf32>
    %c0_4 = arith.constant 0 : index
    %c0_5 = arith.constant 0 : index
    %10 = vector.load %arg2[%c0_4, %c0_5] : memref<128x32xf32, #tpu.memory_space<vmem>>, vector<128x32xf32>
    %cst = arith.constant dense<0.000000e+00> : vector<8x32xf32>
    %11 = tpu.matmul %9, %10, %cst {dimension_numbers = #tpu.dot_dimension_numbers<[1], [0], [0], [1], [0, 0, 1, 1], [], []>} : vector<8x128xf32>, vector<128x32xf32>, vector<8x32xf32> -> vector<8x32xf32>
    %12 = vector.extract_strided_slice %11 {offsets = [7, 0], sizes = [1, 32], strides = [1, 1]} : vector<8x32xf32> to vector<1x32xf32>
    %c0_6 = arith.constant 0 : index
    %c0_7 = arith.constant 0 : index
    %13 = vector.load %arg4[%c0_6, %c0_7] : memref<32x32xf32, #tpu.memory_space<vmem>>, vector<32x32xf32>
    %cst_8 = arith.constant dense<0.000000e+00> : vector<8x32xf32>
    %14 = tpu.matmul %11, %13, %cst_8 {dimension_numbers = #tpu.dot_dimension_numbers<[1], [0], [0], [1], [0, 0, 1, 1], [], []>} : vector<8x32xf32>, vector<32x32xf32>, vector<8x32xf32> -> vector<8x32xf32>
    %15 = vector.extract_strided_slice %2 {offsets = [1, 0], sizes = [1, 32], strides = [1, 1]} : vector<11x512xf32> to vector<1x32xf32>
    %16 = vector.broadcast %15 : vector<1x32xf32> to vector<8x32xf32>
    %17 = arith.addf %14, %16 : vector<8x32xf32>
    %c0_9 = arith.constant 0 : index
    %c0_10 = arith.constant 0 : index
    %18 = vector.load %arg5[%c0_9, %c0_10] : memref<32x32xf32, #tpu.memory_space<vmem>>, vector<32x32xf32>
    %cst_11 = arith.constant dense<0.000000e+00> : vector<8x32xf32>
    %19 = tpu.matmul %11, %18, %cst_11 {dimension_numbers = #tpu.dot_dimension_numbers<[1], [0], [0], [1], [0, 0, 1, 1], [], []>} : vector<8x32xf32>, vector<32x32xf32>, vector<8x32xf32> -> vector<8x32xf32>
    %20 = vector.extract_strided_slice %2 {offsets = [2, 0], sizes = [1, 32], strides = [1, 1]} : vector<11x512xf32> to vector<1x32xf32>
    %21 = vector.broadcast %20 : vector<1x32xf32> to vector<8x32xf32>
    %22 = arith.addf %19, %21 : vector<8x32xf32>
    %c0_12 = arith.constant 0 : index
    %c0_13 = arith.constant 0 : index
    %23 = vector.load %arg3[%c0_12, %c0_13] : memref<32x32xf32, #tpu.memory_space<vmem>>, vector<32x32xf32>
    %cst_14 = arith.constant dense<0.000000e+00> : vector<1x32xf32>
    %24 = tpu.matmul %12, %23, %cst_14 {dimension_numbers = #tpu.dot_dimension_numbers<[1], [0], [0], [1], [0, 0, 1, 1], [], []>} : vector<1x32xf32>, vector<32x32xf32>, vector<1x32xf32> -> vector<1x32xf32>
    %25 = vector.extract_strided_slice %2 {offsets = [0, 0], sizes = [1, 32], strides = [1, 1]} : vector<11x512xf32> to vector<1x32xf32>
    %26 = arith.addf %24, %25 : vector<1x32xf32>
    %27 = tpu.transpose %17, [1, 0] : vector<8x32xf32> -> vector<32x8xf32>
    %cst_15 = arith.constant dense<0.000000e+00> : vector<1x8xf32>
    %28 = tpu.matmul %26, %27, %cst_15 {dimension_numbers = #tpu.dot_dimension_numbers<[1], [0], [0], [1], [0, 0, 1, 1], [], []>} : vector<1x32xf32>, vector<32x8xf32>, vector<1x8xf32> -> vector<1x8xf32>
    %c0_i32 = arith.constant 0 : i32
    %29 = vector.broadcast %c0_i32 : i32 to vector<1x8xi32>
    %30 = arith.cmpi eq, %1, %29 : vector<1x8xi32>
    %cst_16 = arith.constant -1.000000e+30 : f32
    %cst_17 = arith.constant 0.000000e+00 : f32
    %31 = vector.broadcast %cst_16 : f32 to vector<1x8xf32>
    %32 = vector.broadcast %cst_17 : f32 to vector<1x8xf32>
    %33 = arith.select %30, %31, %32 : vector<1x8xi1>, vector<1x8xf32>
    %34 = arith.addf %28, %33 : vector<1x8xf32>
    %cst_18 = arith.constant dense<0xFF800000> : vector<1xf32>
    %35 = vector.multi_reduction <maximumf>, %34, %cst_18 [1] : vector<1x8xf32> to vector<1xf32>
    %36 = vector.shape_cast %35 : vector<1xf32> to vector<1x1xf32>
    %37 = vector.broadcast %36 : vector<1x1xf32> to vector<1x8xf32>
    %38 = arith.subf %34, %37 : vector<1x8xf32>
    %39 = math.exp %38 : vector<1x8xf32>
    %cst_19 = arith.constant dense<0.000000e+00> : vector<1xf32>
    %40 = vector.multi_reduction <add>, %39, %cst_19 [1] : vector<1x8xf32> to vector<1xf32>
    %41 = vector.shape_cast %40 : vector<1xf32> to vector<1x1xf32>
    %42 = tpu.reciprocal %41 : vector<1x1xf32> -> vector<1x1xf32>
    %43 = vector.broadcast %42 : vector<1x1xf32> to vector<1x8xf32>
    %44 = arith.mulf %39, %43 : vector<1x8xf32>
    %cst_20 = arith.constant dense<0.000000e+00> : vector<1x32xf32>
    %45 = tpu.matmul %44, %22, %cst_20 {dimension_numbers = #tpu.dot_dimension_numbers<[1], [0], [0], [1], [0, 0, 1, 1], [], []>} : vector<1x8xf32>, vector<8x32xf32>, vector<1x32xf32> -> vector<1x32xf32>
    %c0_21 = arith.constant 0 : index
    %c0_22 = arith.constant 0 : index
    %46 = vector.load %arg6[%c0_21, %c0_22] : memref<32x32xf32, #tpu.memory_space<vmem>>, vector<32x32xf32>
    %cst_23 = arith.constant dense<0.000000e+00> : vector<1x32xf32>
    %47 = tpu.matmul %45, %46, %cst_23 {dimension_numbers = #tpu.dot_dimension_numbers<[1], [0], [0], [1], [0, 0, 1, 1], [], []>} : vector<1x32xf32>, vector<32x32xf32>, vector<1x32xf32> -> vector<1x32xf32>
    %48 = vector.extract_strided_slice %2 {offsets = [3, 0], sizes = [1, 32], strides = [1, 1]} : vector<11x512xf32> to vector<1x32xf32>
    %49 = arith.addf %47, %48 : vector<1x32xf32>
    %50 = arith.addf %12, %49 : vector<1x32xf32>
    %51 = vector.extract_strided_slice %2 {offsets = [4, 0], sizes = [1, 32], strides = [1, 1]} : vector<11x512xf32> to vector<1x32xf32>
    %52 = vector.extract_strided_slice %2 {offsets = [5, 0], sizes = [1, 32], strides = [1, 1]} : vector<11x512xf32> to vector<1x32xf32>
    %cst_24 = arith.constant dense<0.000000e+00> : vector<1xf32>
    %53 = vector.multi_reduction <add>, %50, %cst_24 [1] : vector<1x32xf32> to vector<1xf32>
    %54 = vector.shape_cast %53 : vector<1xf32> to vector<1x1xf32>
    %cst_25 = arith.constant 3.200000e+01 : f32
    %55 = vector.broadcast %cst_25 : f32 to vector<1x1xf32>
    %56 = arith.divf %54, %55 : vector<1x1xf32>
    %57 = vector.broadcast %56 : vector<1x1xf32> to vector<1x32xf32>
    %58 = arith.subf %50, %57 : vector<1x32xf32>
    %59 = arith.mulf %58, %58 : vector<1x32xf32>
    %cst_26 = arith.constant dense<0.000000e+00> : vector<1xf32>
    %60 = vector.multi_reduction <add>, %59, %cst_26 [1] : vector<1x32xf32> to vector<1xf32>
    %61 = vector.shape_cast %60 : vector<1xf32> to vector<1x1xf32>
    %cst_27 = arith.constant 3.200000e+01 : f32
    %62 = vector.broadcast %cst_27 : f32 to vector<1x1xf32>
    %63 = arith.divf %61, %62 : vector<1x1xf32>
    %64 = vector.broadcast %56 : vector<1x1xf32> to vector<1x32xf32>
    %65 = arith.subf %50, %64 : vector<1x32xf32>
    %cst_28 = arith.constant 9.99999974E-6 : f32
    %66 = vector.broadcast %cst_28 : f32 to vector<1x1xf32>
    %67 = arith.addf %63, %66 : vector<1x1xf32>
    %68 = math.rsqrt %67 : vector<1x1xf32>
    %69 = vector.broadcast %68 : vector<1x1xf32> to vector<1x32xf32>
    %70 = arith.mulf %65, %69 : vector<1x32xf32>
    %71 = arith.mulf %70, %51 : vector<1x32xf32>
    %72 = arith.addf %71, %52 : vector<1x32xf32>
    %c0_29 = arith.constant 0 : index
    %c0_30 = arith.constant 0 : index
    %73 = vector.load %arg7[%c0_29, %c0_30] : memref<32x512xf32, #tpu.memory_space<vmem>>, vector<32x512xf32>
    %cst_31 = arith.constant dense<0.000000e+00> : vector<1x512xf32>
    %74 = tpu.matmul %72, %73, %cst_31 {dimension_numbers = #tpu.dot_dimension_numbers<[1], [0], [0], [1], [0, 0, 1, 1], [], []>} : vector<1x32xf32>, vector<32x512xf32>, vector<1x512xf32> -> vector<1x512xf32>
    %75 = vector.extract_strided_slice %2 {offsets = [6, 0], sizes = [1, 512], strides = [1, 1]} : vector<11x512xf32> to vector<1x512xf32>
    %76 = arith.addf %74, %75 : vector<1x512xf32>
    %cst_32 = arith.constant 0.000000e+00 : f32
    %77 = vector.broadcast %cst_32 : f32 to vector<1x512xf32>
    %78 = arith.maximumf %76, %77 : vector<1x512xf32>
    %c0_33 = arith.constant 0 : index
    %c0_34 = arith.constant 0 : index
    %79 = vector.load %arg8[%c0_33, %c0_34] : memref<512x32xf32, #tpu.memory_space<vmem>>, vector<512x32xf32>
    %cst_35 = arith.constant dense<0.000000e+00> : vector<1x32xf32>
    %80 = tpu.matmul %78, %79, %cst_35 {dimension_numbers = #tpu.dot_dimension_numbers<[1], [0], [0], [1], [0, 0, 1, 1], [], []>} : vector<1x512xf32>, vector<512x32xf32>, vector<1x32xf32> -> vector<1x32xf32>
    %81 = vector.extract_strided_slice %2 {offsets = [7, 0], sizes = [1, 32], strides = [1, 1]} : vector<11x512xf32> to vector<1x32xf32>
    %82 = arith.addf %80, %81 : vector<1x32xf32>
    %83 = arith.addf %72, %82 : vector<1x32xf32>
    %84 = vector.extract_strided_slice %2 {offsets = [8, 0], sizes = [1, 32], strides = [1, 1]} : vector<11x512xf32> to vector<1x32xf32>
    %85 = vector.extract_strided_slice %2 {offsets = [9, 0], sizes = [1, 32], strides = [1, 1]} : vector<11x512xf32> to vector<1x32xf32>
    %cst_36 = arith.constant dense<0.000000e+00> : vector<1xf32>
    %86 = vector.multi_reduction <add>, %83, %cst_36 [1] : vector<1x32xf32> to vector<1xf32>
    %87 = vector.shape_cast %86 : vector<1xf32> to vector<1x1xf32>
    %cst_37 = arith.constant 3.200000e+01 : f32
    %88 = vector.broadcast %cst_37 : f32 to vector<1x1xf32>
    %89 = arith.divf %87, %88 : vector<1x1xf32>
    %90 = vector.broadcast %89 : vector<1x1xf32> to vector<1x32xf32>
    %91 = arith.subf %83, %90 : vector<1x32xf32>
    %92 = arith.mulf %91, %91 : vector<1x32xf32>
    %cst_38 = arith.constant dense<0.000000e+00> : vector<1xf32>
    %93 = vector.multi_reduction <add>, %92, %cst_38 [1] : vector<1x32xf32> to vector<1xf32>
    %94 = vector.shape_cast %93 : vector<1xf32> to vector<1x1xf32>
    %cst_39 = arith.constant 3.200000e+01 : f32
    %95 = vector.broadcast %cst_39 : f32 to vector<1x1xf32>
    %96 = arith.divf %94, %95 : vector<1x1xf32>
    %97 = vector.broadcast %89 : vector<1x1xf32> to vector<1x32xf32>
    %98 = arith.subf %83, %97 : vector<1x32xf32>
    %cst_40 = arith.constant 9.99999974E-6 : f32
    %99 = vector.broadcast %cst_40 : f32 to vector<1x1xf32>
    %100 = arith.addf %96, %99 : vector<1x1xf32>
    %101 = math.rsqrt %100 : vector<1x1xf32>
    %102 = vector.broadcast %101 : vector<1x1xf32> to vector<1x32xf32>
    %103 = arith.mulf %98, %102 : vector<1x32xf32>
    %104 = arith.mulf %103, %84 : vector<1x32xf32>
    %105 = arith.addf %104, %85 : vector<1x32xf32>
    %c0_41 = arith.constant 0 : index
    %c0_42 = arith.constant 0 : index
    %106 = vector.load %arg9[%c0_41, %c0_42] : memref<32x128xf32, #tpu.memory_space<vmem>>, vector<32x128xf32>
    %cst_43 = arith.constant dense<0.000000e+00> : vector<1x128xf32>
    %107 = tpu.matmul %105, %106, %cst_43 {dimension_numbers = #tpu.dot_dimension_numbers<[1], [0], [0], [1], [0, 0, 1, 1], [], []>} : vector<1x32xf32>, vector<32x128xf32>, vector<1x128xf32> -> vector<1x128xf32>
    %108 = vector.extract_strided_slice %2 {offsets = [10, 0], sizes = [1, 128], strides = [1, 1]} : vector<11x512xf32> to vector<1x128xf32>
    %109 = arith.addf %107, %108 : vector<1x128xf32>
    %110 = vector.shape_cast %109 : vector<1x128xf32> to vector<1x1x128xf32>
    %c0_44 = arith.constant 0 : index
    %c0_45 = arith.constant 0 : index
    %c0_46 = arith.constant 0 : index
    %111 = vector.load %arg11[%c0_44, %c0_45, %c0_46] : memref<1x1x128xf32, #tpu.memory_space<vmem>>, vector<1x1x128xf32>
    tpu.vector_store %arg11[%c0_44, %c0_45, %c0_46], %110 {strides = array<i32>} : memref<1x1x128xf32, #tpu.memory_space<vmem>>, vector<1x1x128xf32>,
    return
  }
  func.func @transform_0(%arg0: i32) -> (i32, i32, i32) {
    %c0_i32 = arith.constant 0 : i32
    %c0_i32_0 = arith.constant 0 : i32
    %c0_i32_1 = arith.constant 0 : i32
    return %arg0, %c0_i32, %c0_i32_0 : i32, i32, i32
  }
  func.func @transform_1(%arg0: i32) -> (i32, i32) {
    %c0_i32 = arith.constant 0 : i32
    %c0_i32_0 = arith.constant 0 : i32
    %c0_i32_1 = arith.constant 0 : i32
    return %c0_i32, %c0_i32_0 : i32, i32
  }
  func.func @transform_2(%arg0: i32) -> (i32, i32) {
    %c0_i32 = arith.constant 0 : i32
    %c0_i32_0 = arith.constant 0 : i32
    %c0_i32_1 = arith.constant 0 : i32
    return %c0_i32, %c0_i32_0 : i32, i32
  }
  func.func @transform_3(%arg0: i32) -> (i32, i32) {
    %c0_i32 = arith.constant 0 : i32
    %c0_i32_0 = arith.constant 0 : i32
    %c0_i32_1 = arith.constant 0 : i32
    return %c0_i32, %c0_i32_0 : i32, i32
  }
  func.func @transform_4(%arg0: i32) -> (i32, i32) {
    %c0_i32 = arith.constant 0 : i32
    %c0_i32_0 = arith.constant 0 : i32
    %c0_i32_1 = arith.constant 0 : i32
    return %c0_i32, %c0_i32_0 : i32, i32
  }
  func.func @transform_5(%arg0: i32) -> (i32, i32) {
    %c0_i32 = arith.constant 0 : i32
    %c0_i32_0 = arith.constant 0 : i32
    %c0_i32_1 = arith.constant 0 : i32
    return %c0_i32, %c0_i32_0 : i32, i32
  }
  func.func @transform_6(%arg0: i32) -> (i32, i32) {
    %c0_i32 = arith.constant 0 : i32
    %c0_i32_0 = arith.constant 0 : i32
    %c0_i32_1 = arith.constant 0 : i32
    return %c0_i32, %c0_i32_0 : i32, i32
  }
  func.func @transform_7(%arg0: i32) -> (i32, i32) {
    %c0_i32 = arith.constant 0 : i32
    %c0_i32_0 = arith.constant 0 : i32
    %c0_i32_1 = arith.constant 0 : i32
    return %c0_i32, %c0_i32_0 : i32, i32
  }
  func.func @transform_8(%arg0: i32) -> (i32, i32) {
    %c0_i32 = arith.constant 0 : i32
    %c0_i32_0 = arith.constant 0 : i32
    %c0_i32_1 = arith.constant 0 : i32
    return %c0_i32, %c0_i32_0 : i32, i32
  }
  func.func @transform_9(%arg0: i32) -> (i32, i32) {
    %c0_i32 = arith.constant 0 : i32
    %c0_i32_0 = arith.constant 0 : i32
    %c0_i32_1 = arith.constant 0 : i32
    return %c0_i32, %c0_i32_0 : i32, i32
  }
  func.func @transform_10(%arg0: i32) -> (i32, i32, i32) {
    %c0_i32 = arith.constant 0 : i32
    %c0_i32_0 = arith.constant 0 : i32
    %c0_i32_1 = arith.constant 0 : i32
    return %arg0, %c0_i32, %c0_i32_0 : i32, i32, i32
  }
}

</mosaic_0001>

<llo_original>
// kernel: tpu_custom_call.1
$region0: #{tpu_custom_call.1}
  #allocation0 [shape = 'u32[]', space=smem, size = 0x4, offset = 0x4, fixed_abs, tag = 'smem constant byte address 0x4 - core index']
  #allocation1 [shape = 'u32[72,128]{1,0:T(1,128)}', space=vmem, size = 0x9000, scoped, tag = 'internal scratch']
  %s0 = inlined_call_operand.vmem [shape: s32[2,1,8], index: 0, kind: input, shape index: {}]
  %s1 = inlined_call_operand.vmem [shape: f32[128,32], index: 1, kind: input, shape index: {}]
  %s2 = inlined_call_operand.vmem [shape: f32[32,32], index: 2, kind: input, shape index: {}]
  %s3 = inlined_call_operand.vmem [shape: f32[32,32], index: 3, kind: input, shape index: {}]
  %s4 = inlined_call_operand.vmem [shape: f32[32,32], index: 4, kind: input, shape index: {}]
  %s5 = inlined_call_operand.vmem [shape: f32[32,32], index: 5, kind: input, shape index: {}]
  %s6 = inlined_call_operand.vmem [shape: f32[32,512], index: 6, kind: input, shape index: {}]
  %s7 = inlined_call_operand.vmem [shape: f32[512,32], index: 7, kind: input, shape index: {}]
  %s8 = inlined_call_operand.vmem [shape: f32[32,128], index: 8, kind: input, shape index: {}]
  %s9 = inlined_call_operand.vmem [shape: f32[11,512], index: 9, kind: input, shape index: {}]
  %s10 = inlined_call_operand.hbm [shape: f32[2,1,128], index: 10, kind: output, shape index: {}]
  %s11 = sld [smem:[#allocation0]]
  $region73: #{tpu_custom_call.1} parent=0
    _
  %s13 = ssub.s32 1, %s11
  %s14 = scalar_select 0, %s13, %s11
  $region1: #{tpu_custom_call.1} parent=0
    #allocation2 [shape = 'u8[1024]{0}', space=vmem, size = 0x400, scoped, tag = 'output window, operand 0']
    #allocation3 [shape = 's32[2]{0}', space=sflag, size = 0x8, scoped, tag = 'scoped memory for tpu_custom_call.1']
    %15 = vsyncpa [#allocation3], 0
    %s16 = scalar_lea.sflag [#allocation3], 1
    %17 = vsyncpa %s16, 0
    loop: start=0, step=1, limit=4
    $region2: #{tpu_custom_call.1} parent=1 // loop_pre_header
      _
    $region3: #{tpu_custom_call.1} parent=1 // loop_header
      %s19 = sphi 0, %s23
      %p20 = scmp.ge.s32.totalorder %s19, 4
      %s29 = sphi 0, %s31
      %s32 = sphi 0, %s29
      %s33 = sphi 0, %s32
      %s49 = sphi 0, %s33
      %s53 = sphi 0, %s53
      %s55 = sphi 0, %s53
      %s56 = sphi 0, %s55
      %s70 = sphi 0, %s56
      %s74 = sphi 0, %s74
      %s76 = sphi 0, %s74
      %s77 = sphi 0, %s76
      %s91 = sphi 0, %s77
      %s95 = sphi 0, %s95
      %s97 = sphi 0, %s95
      %s98 = sphi 0, %s97
      %s112 = sphi 0, %s98
      %s116 = sphi 0, %s116
      %s118 = sphi 0, %s116
      %s119 = sphi 0, %s118
      %s133 = sphi 0, %s119
      %s137 = sphi 0, %s137
      %s139 = sphi 0, %s137
      %s140 = sphi 0, %s139
      %s154 = sphi 0, %s140
      %s158 = sphi 0, %s158
      %s160 = sphi 0, %s158
      %s161 = sphi 0, %s160
      %s175 = sphi 0, %s161
      %s179 = sphi 0, %s179
      %s181 = sphi 0, %s179
      %s182 = sphi 0, %s181
      %s196 = sphi 0, %s182
      %s200 = sphi 0, %s200
      %s202 = sphi 0, %s200
      %s203 = sphi 0, %s202
      %s217 = sphi 0, %s203
      %s221 = sphi 0, %s221
      %s223 = sphi 0, %s221
      %s224 = sphi 0, %s223
      %s238 = sphi 0, %s224
      %s244 = sphi 0, %s246
      %s247 = sphi 0, %s244
      %s248 = sphi 0, %s247
      %s264 = sphi 0, %s248
    $region4: #{tpu_custom_call.1} parent=1 // loop_header_branch
      %22 = sbr.rel (%p20) target = $region8
    $region5: #{tpu_custom_call.1} parent=1 // loop_body
      %s24 = ssub.s32 %s19, 1
      %s25 = ssub.s32 %s19, 2
      %s26 = sadd.s32 %s19, 1
      %s27 = ssub.s32 %s19, %s26
      %p28 = scmp.eq.s32.totalorder %s27, 0
      %s30 = sadd.s32 %s29, 1
      %s31 = scalar_select %p28, %s29, %s30
      %p34 = pneg %p28
      %p35 = scmp.eq.s32.totalorder %s19, 1
      %p36 = por %p34, %p35
      %p37 = scmp.ne.s32.totalorder %s29, %s32
      %p38 = scmp.eq.s32.totalorder %s19, 0
      %p39 = por %p37, %p38
      %p40 = scmp.ne.s32.totalorder %s29, %s32
      %p41 = scmp.eq.s32.totalorder %s24, 1
      %p42 = por %p40, %p41
      %p43 = scmp.ne.s32.totalorder %s32, %s33
      %p44 = scmp.eq.s32.totalorder %s24, 0
      %p45 = por %p43, %p44
      %p46 = scmp.ne.s32.totalorder %s32, %s33
      %p47 = scmp.eq.s32.totalorder %s25, 1
      %p48 = por %p46, %p47
      %p50 = scmp.ne.s32.totalorder %s33, %s49
      %p51 = scmp.eq.s32.totalorder %s25, 0
      %p52 = por %p50, %p51
      %s54 = sadd.s32 %s53, 1
      %p57 = scmp.eq.s32.totalorder %s19, 1
      %p58 = scmp.ne.s32.totalorder %s53, %s55
      %p59 = scmp.eq.s32.totalorder %s19, 0
      %p60 = por %p58, %p59
      %p61 = scmp.ne.s32.totalorder %s53, %s55
      %p62 = scmp.eq.s32.totalorder %s24, 1
      %p63 = por %p61, %p62
      %p64 = scmp.ne.s32.totalorder %s55, %s56
      %p65 = scmp.eq.s32.totalorder %s24, 0
      %p66 = por %p64, %p65
      %p67 = scmp.ne.s32.totalorder %s55, %s56
      %p68 = scmp.eq.s32.totalorder %s25, 1
      %p69 = por %p67, %p68
      %p71 = scmp.ne.s32.totalorder %s56, %s70
      %p72 = scmp.eq.s32.totalorder %s25, 0
      %p73 = por %p71, %p72
      %s75 = sadd.s32 %s74, 1
      %p78 = scmp.eq.s32.totalorder %s19, 1
      %p79 = scmp.ne.s32.totalorder %s74, %s76
      %p80 = scmp.eq.s32.totalorder %s19, 0
      %p81 = por %p79, %p80
      %p82 = scmp.ne.s32.totalorder %s74, %s76
      %p83 = scmp.eq.s32.totalorder %s24, 1
      %p84 = por %p82, %p83
      %p85 = scmp.ne.s32.totalorder %s76, %s77
      %p86 = scmp.eq.s32.totalorder %s24, 0
      %p87 = por %p85, %p86
      %p88 = scmp.ne.s32.totalorder %s76, %s77
      %p89 = scmp.eq.s32.totalorder %s25, 1
      %p90 = por %p88, %p89
      %p92 = scmp.ne.s32.totalorder %s77, %s91
      %p93 = scmp.eq.s32.totalorder %s25, 0
      %p94 = por %p92, %p93
      %s96 = sadd.s32 %s95, 1
      %p99 = scmp.eq.s32.totalorder %s19, 1
      %p100 = scmp.ne.s32.totalorder %s95, %s97
      %p101 = scmp.eq.s32.totalorder %s19, 0
      %p102 = por %p100, %p101
      %p103 = scmp.ne.s32.totalorder %s95, %s97
      %p104 = scmp.eq.s32.totalorder %s24, 1
      %p105 = por %p103, %p104
      %p106 = scmp.ne.s32.totalorder %s97, %s98
      %p107 = scmp.eq.s32.totalorder %s24, 0
      %p108 = por %p106, %p107
      %p109 = scmp.ne.s32.totalorder %s97, %s98
      %p110 = scmp.eq.s32.totalorder %s25, 1
      %p111 = por %p109, %p110
      %p113 = scmp.ne.s32.totalorder %s98, %s112
      %p114 = scmp.eq.s32.totalorder %s25, 0
      %p115 = por %p113, %p114
      %s117 = sadd.s32 %s116, 1
      %p120 = scmp.eq.s32.totalorder %s19, 1
      %p121 = scmp.ne.s32.totalorder %s116, %s118
      %p122 = scmp.eq.s32.totalorder %s19, 0
      %p123 = por %p121, %p122
      %p124 = scmp.ne.s32.totalorder %s116, %s118
      %p125 = scmp.eq.s32.totalorder %s24, 1
      %p126 = por %p124, %p125
      %p127 = scmp.ne.s32.totalorder %s118, %s119
      %p128 = scmp.eq.s32.totalorder %s24, 0
      %p129 = por %p127, %p128
      %p130 = scmp.ne.s32.totalorder %s118, %s119
      %p131 = scmp.eq.s32.totalorder %s25, 1
      %p132 = por %p130, %p131
      %p134 = scmp.ne.s32.totalorder %s119, %s133
      %p135 = scmp.eq.s32.totalorder %s25, 0
      %p136 = por %p134, %p135
      %s138 = sadd.s32 %s137, 1
      %p141 = scmp.eq.s32.totalorder %s19, 1
      %p142 = scmp.ne.s32.totalorder %s137, %s139
      %p143 = scmp.eq.s32.totalorder %s19, 0
      %p144 = por %p142, %p143
      %p145 = scmp.ne.s32.totalorder %s137, %s139
      %p146 = scmp.eq.s32.totalorder %s24, 1
      %p147 = por %p145, %p146
      %p148 = scmp.ne.s32.totalorder %s139, %s140
      %p149 = scmp.eq.s32.totalorder %s24, 0
      %p150 = por %p148, %p149
      %p151 = scmp.ne.s32.totalorder %s139, %s140
      %p152 = scmp.eq.s32.totalorder %s25, 1
      %p153 = por %p151, %p152
      %p155 = scmp.ne.s32.totalorder %s140, %s154
      %p156 = scmp.eq.s32.totalorder %s25, 0
      %p157 = por %p155, %p156
      %s159 = sadd.s32 %s158, 1
      %p162 = scmp.eq.s32.totalorder %s19, 1
      %p163 = scmp.ne.s32.totalorder %s158, %s160
      %p164 = scmp.eq.s32.totalorder %s19, 0
      %p165 = por %p163, %p164
      %p166 = scmp.ne.s32.totalorder %s158, %s160
      %p167 = scmp.eq.s32.totalorder %s24, 1
      %p168 = por %p166, %p167
      %p169 = scmp.ne.s32.totalorder %s160, %s161
      %p170 = scmp.eq.s32.totalorder %s24, 0
      %p171 = por %p169, %p170
      %p172 = scmp.ne.s32.totalorder %s160, %s161
      %p173 = scmp.eq.s32.totalorder %s25, 1
      %p174 = por %p172, %p173
      %p176 = scmp.ne.s32.totalorder %s161, %s175
      %p177 = scmp.eq.s32.totalorder %s25, 0
      %p178 = por %p176, %p177
      %s180 = sadd.s32 %s179, 1
      %p183 = scmp.eq.s32.totalorder %s19, 1
      %p184 = scmp.ne.s32.totalorder %s179, %s181
      %p185 = scmp.eq.s32.totalorder %s19, 0
      %p186 = por %p184, %p185
      %p187 = scmp.ne.s32.totalorder %s179, %s181
      %p188 = scmp.eq.s32.totalorder %s24, 1
      %p189 = por %p187, %p188
      %p190 = scmp.ne.s32.totalorder %s181, %s182
      %p191 = scmp.eq.s32.totalorder %s24, 0
      %p192 = por %p190, %p191
      %p193 = scmp.ne.s32.totalorder %s181, %s182
      %p194 = scmp.eq.s32.totalorder %s25, 1
      %p195 = por %p193, %p194
      %p197 = scmp.ne.s32.totalorder %s182, %s196
      %p198 = scmp.eq.s32.totalorder %s25, 0
      %p199 = por %p197, %p198
      %s201 = sadd.s32 %s200, 1
      %p204 = scmp.eq.s32.totalorder %s19, 1
      %p205 = scmp.ne.s32.totalorder %s200, %s202
      %p206 = scmp.eq.s32.totalorder %s19, 0
      %p207 = por %p205, %p206
      %p208 = scmp.ne.s32.totalorder %s200, %s202
      %p209 = scmp.eq.s32.totalorder %s24, 1
      %p210 = por %p208, %p209
      %p211 = scmp.ne.s32.totalorder %s202, %s203
      %p212 = scmp.eq.s32.totalorder %s24, 0
      %p213 = por %p211, %p212
      %p214 = scmp.ne.s32.totalorder %s202, %s203
      %p215 = scmp.eq.s32.totalorder %s25, 1
      %p216 = por %p214, %p215
      %p218 = scmp.ne.s32.totalorder %s203, %s217
      %p219 = scmp.eq.s32.totalorder %s25, 0
      %p220 = por %p218, %p219
      %s222 = sadd.s32 %s221, 1
      %p225 = scmp.eq.s32.totalorder %s19, 1
      %p226 = scmp.ne.s32.totalorder %s221, %s223
      %p227 = scmp.eq.s32.totalorder %s19, 0
      %p228 = por %p226, %p227
      %p229 = scmp.ne.s32.totalorder %s221, %s223
      %p230 = scmp.eq.s32.totalorder %s24, 1
      %p231 = por %p229, %p230
      %p232 = scmp.ne.s32.totalorder %s223, %s224
      %p233 = scmp.eq.s32.totalorder %s24, 0
      %p234 = por %p232, %p233
      %p235 = scmp.ne.s32.totalorder %s223, %s224
      %p236 = scmp.eq.s32.totalorder %s25, 1
      %p237 = por %p235, %p236
      %p239 = scmp.ne.s32.totalorder %s224, %s238
      %p240 = scmp.eq.s32.totalorder %s25, 0
      %p241 = por %p239, %p240
      %s242 = ssub.s32 %s19, %s26
      %p243 = scmp.eq.s32.totalorder %s242, 0
      %s245 = sadd.s32 %s244, 1
      %s246 = scalar_select %p243, %s244, %s245
      %p249 = pneg %p243
      %p250 = scmp.eq.s32.totalorder %s19, 1
      %p251 = por %p249, %p250
      %p252 = scmp.ne.s32.totalorder %s244, %s247
      %p253 = scmp.eq.s32.totalorder %s19, 0
      %p254 = por %p252, %p253
      %p255 = scmp.ne.s32.totalorder %s244, %s247
      %p256 = scmp.eq.s32.totalorder %s24, 1
      %p257 = por %p255, %p256
      %p258 = scmp.ne.s32.totalorder %s247, %s248
      %p259 = scmp.eq.s32.totalorder %s24, 0
      %p260 = por %p258, %p259
      %p261 = scmp.ne.s32.totalorder %s247, %s248
      %p262 = scmp.eq.s32.totalorder %s25, 1
      %p263 = por %p261, %p262
      %p265 = scmp.ne.s32.totalorder %s248, %s264
      %p266 = scmp.eq.s32.totalorder %s25, 0
      %p267 = por %p265, %p266
      %p268 = scmp.le.s32.totalorder 1, %s19
      %p269 = scmp.lt.s32.totalorder %s19, 3
      %p270 = pnand %p268, %p269
      %p271 = pneg %p270
      // Predicated region
      $region9: #{tpu_custom_call.1} parent=5 // pred_check
        _
      $region10: #{tpu_custom_call.1} parent=5 // pred_check_branch
        %273 = sbr.rel (%p270) target = $region12
      $region11: #{tpu_custom_call.1} parent=5 // pred_region
        %s274 = ssub.s32 %s19, 1
        // Predicated region
        $region13: #{tpu_custom_call.1} parent=11 // pred_check
          %p275 = pneg %p66
        $region14: #{tpu_custom_call.1} parent=11 // pred_check_branch
          %277 = sbr.rel (%p275) target = $region16
        $region15: #{tpu_custom_call.1} parent=11 // pred_region
          _
        $region16: #{tpu_custom_call.1} parent=11 // pred_fallthru
          _
        // Predicated region
        $region17: #{tpu_custom_call.1} parent=11 // pred_check
          %p278 = pneg %p87
        $region18: #{tpu_custom_call.1} parent=11 // pred_check_branch
          %280 = sbr.rel (%p278) target = $region20
        $region19: #{tpu_custom_call.1} parent=11 // pred_region
          _
        $region20: #{tpu_custom_call.1} parent=11 // pred_fallthru
          _
        // Predicated region
        $region21: #{tpu_custom_call.1} parent=11 // pred_check
          %p281 = pneg %p108
        $region22: #{tpu_custom_call.1} parent=11 // pred_check_branch
          %283 = sbr.rel (%p281) target = $region24
        $region23: #{tpu_custom_call.1} parent=11 // pred_region
          _
        $region24: #{tpu_custom_call.1} parent=11 // pred_fallthru
          _
        // Predicated region
        $region25: #{tpu_custom_call.1} parent=11 // pred_check
          %p284 = pneg %p129
        $region26: #{tpu_custom_call.1} parent=11 // pred_check_branch
          %286 = sbr.rel (%p284) target = $region28
        $region27: #{tpu_custom_call.1} parent=11 // pred_region
          _
        $region28: #{tpu_custom_call.1} parent=11 // pred_fallthru
          _
        // Predicated region
        $region29: #{tpu_custom_call.1} parent=11 // pred_check
          %p287 = pneg %p150
        $region30: #{tpu_custom_call.1} parent=11 // pred_check_branch
          %289 = sbr.rel (%p287) target = $region32
        $region31: #{tpu_custom_call.1} parent=11 // pred_region
          _
        $region32: #{tpu_custom_call.1} parent=11 // pred_fallthru
          _
        // Predicated region
        $region33: #{tpu_custom_call.1} parent=11 // pred_check
          %p290 = pneg %p171
        $region34: #{tpu_custom_call.1} parent=11 // pred_check_branch
          %292 = sbr.rel (%p290) target = $region36
        $region35: #{tpu_custom_call.1} parent=11 // pred_region
          _
        $region36: #{tpu_custom_call.1} parent=11 // pred_fallthru
          _
        // Predicated region
        $region37: #{tpu_custom_call.1} parent=11 // pred_check
          %p293 = pneg %p192
        $region38: #{tpu_custom_call.1} parent=11 // pred_check_branch
          %295 = sbr.rel (%p293) target = $region40
        $region39: #{tpu_custom_call.1} parent=11 // pred_region
          _
        $region40: #{tpu_custom_call.1} parent=11 // pred_fallthru
          _
        // Predicated region
        $region41: #{tpu_custom_call.1} parent=11 // pred_check
          %p296 = pneg %p213
        $region42: #{tpu_custom_call.1} parent=11 // pred_check_branch
          %298 = sbr.rel (%p296) target = $region44
        $region43: #{tpu_custom_call.1} parent=11 // pred_region
          _
        $region44: #{tpu_custom_call.1} parent=11 // pred_fallthru
          _
        // Predicated region
        $region45: #{tpu_custom_call.1} parent=11 // pred_check
          %p299 = pneg %p234
        $region46: #{tpu_custom_call.1} parent=11 // pred_check_branch
          %301 = sbr.rel (%p299) target = $region48
        $region47: #{tpu_custom_call.1} parent=11 // pred_region
          _
        $region48: #{tpu_custom_call.1} parent=11 // pred_fallthru
          _
      $region12: #{tpu_custom_call.1} parent=5 // pred_fallthru
        _
      %p302 = scmp.lt.s32.totalorder %s19, 2
      // Predicated region
      $region49: #{tpu_custom_call.1} parent=5 // pred_check
        %p303 = pneg %p302
      $region50: #{tpu_custom_call.1} parent=5 // pred_check_branch
        %305 = sbr.rel (%p303) target = $region52
      $region51: #{tpu_custom_call.1} parent=5 // pred_region
        // Predicated region
        $region53: #{tpu_custom_call.1} parent=51 // pred_check
          %p306 = pneg %p39
        $region54: #{tpu_custom_call.1} parent=51 // pred_check_branch
          %308 = sbr.rel (%p306) target = $region56
        $region55: #{tpu_custom_call.1} parent=51 // pred_region
          %p309 = scmp.lt.s32.totalorder %s19, 1
          %s310 = scalar_select %p309, %s19, 1
          %s311 = scalar_lea.vmem %s0, %s310
        $region56: #{tpu_custom_call.1} parent=51 // pred_fallthru
          _
      $region52: #{tpu_custom_call.1} parent=5 // pred_fallthru
        _
      %p312 = scmp.le.s32.totalorder 1, %s19
      %p313 = scmp.lt.s32.totalorder %s19, 3
      %p314 = pnand %p312, %p313
      %p315 = pneg %p314
      // Predicated region
      $region57: #{tpu_custom_call.1} parent=5 // pred_check
        _
      $region58: #{tpu_custom_call.1} parent=5 // pred_check_branch
        %317 = sbr.rel (%p314) target = $region60
      $region59: #{tpu_custom_call.1} parent=5 // pred_region
        %s318 = ssub.s32 %s19, 1
        %p319 = scmp.lt.s32.totalorder %s24, 1
        %s320 = scalar_select %p319, %s24, 1
        %s321 = scalar_lea.vmem %s0, %s320
        %p322 = pneg %p45
        %p323 = pneg %p42
        %p324 = pneg %p66
        %p325 = pneg %p63
        %p326 = pneg %p87
        %p327 = pneg %p84
        %p328 = pneg %p108
        %p329 = pneg %p105
        %p330 = pneg %p129
        %p331 = pneg %p126
        %p332 = pneg %p150
        %p333 = pneg %p147
        %p334 = pneg %p171
        %p335 = pneg %p168
        %p336 = pneg %p192
        %p337 = pneg %p189
        %p338 = pneg %p213
        %p339 = pneg %p210
        %p340 = pneg %p234
        %p341 = pneg %p231
        %p342 = pneg %p260
        %p343 = pneg %p257
        %s344 = sand.u32 %s247, 1
        %s345 = scalar_lea.sflag [#allocation3], %s344
        %s346 = sand.u32 %s247, 1
        %s347 = scalar_lea.vmem [#allocation2], %s346
        %p348 = scmp.lt.s32.totalorder %s24, 1
        %s349 = scalar_select %p348, %s24, 1
        %s350 = scalar_lea.vmem %s0, %s349
        %v351 = vld [vmem:[%s350] sm:$0x1]
        %v352 = vld [vmem:[%s9] sm:$0xff]
        %v353 = vld [vmem:[%s9 + $0x8] sm:$0xff]
        %v354 = vld [vmem:[%s9 + $0x10] sm:$0xff]
        %v355 = vld [vmem:[%s9 + $0x18] sm:$0xff]
        %v356 = vld [vmem:[%s9 + $0x20] sm:$0x7]
        %v357 = vperm.slane %v351, 0
        %v358 = vlaneseq
        %v359 = vshrl.u32 %v358, 7
        %361 = vset.pattern.permute.xlu0 %v359
        %362 = vperm.xlu0 %361, %v357
        %v363 = vpop.permute.xlu0 %362
        %v364 = vlaneseq
        %v365 = vand.u32 %v364, 127
        %vm366 = vcmp.eq.s32.totalorder %v363, %v365
        %v367 = vsel %vm366, 1, 0
        %v368 = vcvt.s32.f32 %v367
        %v369 = vld [vmem:[%s1] sm:$0xff]
        %v370 = vld [vmem:[%s1 + $0x8] sm:$0xff]
        %v371 = vld [vmem:[%s1 + $0x10] sm:$0xff]
        %v372 = vld [vmem:[%s1 + $0x18] sm:$0xff]
        %v373 = vld [vmem:[%s1 + $0x20] sm:$0xff]
        %v374 = vld [vmem:[%s1 + $0x28] sm:$0xff]
        %v375 = vld [vmem:[%s1 + $0x30] sm:$0xff]
        %v376 = vld [vmem:[%s1 + $0x38] sm:$0xff]
        %v377 = vld [vmem:[%s1 + $0x40] sm:$0xff]
        %v378 = vld [vmem:[%s1 + $0x48] sm:$0xff]
        %v379 = vld [vmem:[%s1 + $0x50] sm:$0xff]
        %v380 = vld [vmem:[%s1 + $0x58] sm:$0xff]
        %v381 = vld [vmem:[%s1 + $0x60] sm:$0xff]
        %v382 = vld [vmem:[%s1 + $0x68] sm:$0xff]
        %v383 = vld [vmem:[%s1 + $0x70] sm:$0xff]
        %v384 = vld [vmem:[%s1 + $0x78] sm:$0xff]
        %385 = vmatpush.msra.mxu0 %v384
        %386 = vmatpush.msra.mxu0 %v383
        %387 = vmatpush.msra.mxu0 %v382
        %388 = vmatpush.msra.mxu0 %v381
        %389 = vmatpush.msra.mxu0 %v380
        %390 = vmatpush.msra.mxu0 %v379
        %391 = vmatpush.msra.mxu0 %v378
        %392 = vmatpush.msra.mxu0 %v377
        %393 = vmatpush.msra.mxu0 %v376
        %394 = vmatpush.msra.mxu0 %v375
        %395 = vmatpush.msra.mxu0 %v374
        %396 = vmatpush.msra.mxu0 %v373
        %397 = vmatpush.msra.mxu0 %v372
        %398 = vmatpush.msra.mxu0 %v371
        %399 = vmatpush.msra.mxu0 %v370
        %400 = vmatpush.msra.mxu0 %v369
        %401 = vmatmul.f32.gmra.mxu0 %v368
        %v402 = vpop.f32.mrf.mxu0
        %v403 = vadd.f32 0.0, %v402
        %404 = vdwg.mxu0
        %v405 = vld [vmem:[%s3] sm:$0xff]
        %v406 = vld [vmem:[%s3 + $0x8] sm:$0xff]
        %v407 = vld [vmem:[%s3 + $0x10] sm:$0xff]
        %v408 = vld [vmem:[%s3 + $0x18] sm:$0xff]
        %v409 = vperm.slane %v352, 1
        %vm410 = vcmask 261120
        %v412 = vsel %vm410, %v403, 0
        %414 = vmatpush.msra.mxu0 0.0
        %415 = vmatpush.msra.mxu0 0.0
        %416 = vmatpush.msra.mxu0 0.0
        %417 = vmatpush.msra.mxu0 0.0
        %418 = vmatpush.msra.mxu0 0.0
        %419 = vmatpush.msra.mxu0 0.0
        %420 = vmatpush.msra.mxu0 0.0
        %421 = vmatpush.msra.mxu0 0.0
        %422 = vmatpush.msra.mxu0 0.0
        %423 = vmatpush.msra.mxu0 0.0
        %424 = vmatpush.msra.mxu0 0.0
        %425 = vmatpush.msra.mxu0 0.0
        %426 = vmatpush.msra.mxu0 %v408
        %427 = vmatpush.msra.mxu0 %v407
        %428 = vmatpush.msra.mxu0 %v406
        %429 = vmatpush.msra.mxu0 %v405
        %430 = vmatmul.f32.gmra.mxu0 %v412
        %v431 = vpop.f32.mrf.mxu0
        %v432 = vadd.f32 %v409, %v431
        %433 = vdwg.mxu0
        %v434 = vld [vmem:[%s4] sm:$0xff]
        %v435 = vld [vmem:[%s4 + $0x8] sm:$0xff]
        %v436 = vld [vmem:[%s4 + $0x10] sm:$0xff]
        %v437 = vld [vmem:[%s4 + $0x18] sm:$0xff]
        %v438 = vperm.slane %v352, 2
        %439 = vmatpush.msra.mxu0 0.0
        %440 = vmatpush.msra.mxu0 0.0
        %441 = vmatpush.msra.mxu0 0.0
        %442 = vmatpush.msra.mxu0 0.0
        %443 = vmatpush.msra.mxu0 0.0
        %444 = vmatpush.msra.mxu0 0.0
        %445 = vmatpush.msra.mxu0 0.0
        %446 = vmatpush.msra.mxu0 0.0
        %447 = vmatpush.msra.mxu0 0.0
        %448 = vmatpush.msra.mxu0 0.0
        %449 = vmatpush.msra.mxu0 0.0
        %450 = vmatpush.msra.mxu0 0.0
        %451 = vmatpush.msra.mxu0 %v437
        %452 = vmatpush.msra.mxu0 %v436
        %453 = vmatpush.msra.mxu0 %v435
        %454 = vmatpush.msra.mxu0 %v434
        %455 = vmatmul.f32.gmra.mxu0 %v412
        %v456 = vpop.f32.mrf.mxu0
        %v457 = vadd.f32 %v438, %v456
        %458 = vdwg.mxu0
        %v459 = vld [vmem:[%s2] sm:$0xff]
        %v460 = vld [vmem:[%s2 + $0x8] sm:$0xff]
        %v461 = vld [vmem:[%s2 + $0x10] sm:$0xff]
        %v462 = vld [vmem:[%s2 + $0x18] sm:$0xff]
        %v463 = vrot.slane %v403, 7
        %v464 = vsel %vm410, %v463, 0
        %466 = vmatpush.msra.mxu0 0.0
        %467 = vmatpush.msra.mxu0 0.0
        %468 = vmatpush.msra.mxu0 0.0
        %469 = vmatpush.msra.mxu0 0.0
        %470 = vmatpush.msra.mxu0 0.0
        %471 = vmatpush.msra.mxu0 0.0
        %472 = vmatpush.msra.mxu0 0.0
        %473 = vmatpush.msra.mxu0 0.0
        %474 = vmatpush.msra.mxu0 0.0
        %475 = vmatpush.msra.mxu0 0.0
        %476 = vmatpush.msra.mxu0 0.0
        %477 = vmatpush.msra.mxu0 0.0
        %478 = vmatpush.msra.mxu0 %v462
        %479 = vmatpush.msra.mxu0 %v461
        %480 = vmatpush.msra.mxu0 %v460
        %481 = vmatpush.msra.mxu0 %v459
        %482 = vmatmul.f32.gmra.mxu0 %v464
        %v483 = vpop.f32.mrf.mxu0
        %v484 = vadd.f32 %v352, %v483
        %485 = vdwg.mxu0
        %vm486 = vcmp.eq.s32.totalorder %v351, 0
        %v487 = vsel %vm486, -1e+30, 0.0
        %v489 = vsel %vm410, %v484, 0
        %v492 = vsel %vm410, %v432, 0
        %494 = vmatpush.xpose.msra.mxu0 0.0
        %495 = vmatpush.xpose.msra.mxu0 0.0
        %496 = vmatpush.xpose.msra.mxu0 0.0
        %497 = vmatpush.xpose.msra.mxu0 0.0
        %498 = vmatpush.xpose.msra.mxu0 0.0
        %499 = vmatpush.xpose.msra.mxu0 0.0
        %500 = vmatpush.xpose.msra.mxu0 0.0
        %501 = vmatpush.xpose.msra.mxu0 0.0
        %502 = vmatpush.xpose.msra.mxu0 0.0
        %503 = vmatpush.xpose.msra.mxu0 0.0
        %504 = vmatpush.xpose.msra.mxu0 0.0
        %505 = vmatpush.xpose.msra.mxu0 0.0
        %506 = vmatpush.xpose.msra.mxu0 0.0
        %507 = vmatpush.xpose.msra.mxu0 0.0
        %508 = vmatpush.xpose.msra.mxu0 0.0
        %509 = vmatpush.xpose.msra.mxu0 %v492
        %510 = vmatmul.f32.gmra.mxu0 %v489
        %v511 = vpop.f32.mrf.mxu0
        %v512 = vadd.f32 %v487, %v511
        %513 = vdwg.mxu0
        %vm514 = vcmask 57344
        %v515 = vsel %vm514, %v512, -inf
        %516 = vmax.xlane.f32.xlu0 %v515
        %v517 = vpop.xlane.xlu0 %516
        %v518 = vsub.f32 %v512, %v517
        %v519 = vmul.f32 %v518, 1.442695
        %v520 = vpow.pop %v519
        %v521 = vsel %vm514, %v520, 0.0
        %522 = vadd.xlane.f32.xlu0 %v521
        %v523 = vpop.xlane.xlu0 %522
        %v524 = vrcp.pop %v523
        %v525 = vmul.f32 %v523, %v524
        %v526 = vsub.f32 1.0, %v525
        %v527 = vmul.f32 %v524, %v526
        %v528 = vadd.f32 %v524, %v527
        %vm529 = vweird.f32 %v523
        %vm530 = vweird.f32 %v524
        %vm531 = vmor %vm529, %vm530
        %v532 = vsel %vm531, %v524, %v528
        %v533 = vand.u32 2147483647, %v523
        %vm534 = vcmp.eq.f32.partialorder %v533, 8.507059e+37
        %v535 = vand.u32 %v523, 2147483648
        %v536 = vor.u32 1.1754944e-38, %v535
        %v537 = vsel %vm534, %v536, %v532
        %v538 = vmul.f32 %v520, %v537
        %vm539 = vcmask 64512
        %v541 = vsel %vm539, %v538, 0
        %543 = vmatpush.msra.mxu0 0.0
        %544 = vmatpush.msra.mxu0 0.0
        %545 = vmatpush.msra.mxu0 0.0
        %546 = vmatpush.msra.mxu0 0.0
        %547 = vmatpush.msra.mxu0 0.0
        %548 = vmatpush.msra.mxu0 0.0
        %549 = vmatpush.msra.mxu0 0.0
        %550 = vmatpush.msra.mxu0 0.0
        %551 = vmatpush.msra.mxu0 0.0
        %552 = vmatpush.msra.mxu0 0.0
        %553 = vmatpush.msra.mxu0 0.0
        %554 = vmatpush.msra.mxu0 0.0
        %555 = vmatpush.msra.mxu0 0.0
        %556 = vmatpush.msra.mxu0 0.0
        %557 = vmatpush.msra.mxu0 0.0
        %558 = vmatpush.msra.mxu0 %v457
        %559 = vmatmul.f32.gmra.mxu0 %v541
        %v560 = vpop.f32.mrf.mxu0
        %v561 = vadd.f32 0.0, %v560
        %562 = vdwg.mxu0
        %v563 = vld [vmem:[%s5] sm:$0xff]
        %v564 = vld [vmem:[%s5 + $0x8] sm:$0xff]
        %v565 = vld [vmem:[%s5 + $0x10] sm:$0xff]
        %v566 = vld [vmem:[%s5 + $0x18] sm:$0xff]
        %v568 = vrot.slane %v352, 3
        %v571 = vsel %vm410, %v561, 0
        %573 = vmatpush.msra.mxu0 0.0
        %574 = vmatpush.msra.mxu0 0.0
        %575 = vmatpush.msra.mxu0 0.0
        %576 = vmatpush.msra.mxu0 0.0
        %577 = vmatpush.msra.mxu0 0.0
        %578 = vmatpush.msra.mxu0 0.0
        %579 = vmatpush.msra.mxu0 0.0
        %580 = vmatpush.msra.mxu0 0.0
        %581 = vmatpush.msra.mxu0 0.0
        %582 = vmatpush.msra.mxu0 0.0
        %583 = vmatpush.msra.mxu0 0.0
        %584 = vmatpush.msra.mxu0 0.0
        %585 = vmatpush.msra.mxu0 %v566
        %586 = vmatpush.msra.mxu0 %v565
        %587 = vmatpush.msra.mxu0 %v564
        %588 = vmatpush.msra.mxu0 %v563
        %589 = vmatmul.f32.gmra.mxu0 %v571
        %v590 = vpop.f32.mrf.mxu0
        %v591 = vadd.f32 %v568, %v590
        %592 = vdwg.mxu0
        %v594 = vrot.slane %v591, 1
        %v596 = vadd.f32 %v403, %v594
        %vm597 = vcmask 261127
        %v598 = vsel %vm597, %v596, 0.0
        %599 = vadd.xlane.f32.xlu0 %v598
        %v600 = vpop.xlane.xlu0 %599
        %v601 = vrcp.pop 32.0
        %v602 = vmul.f32 32.0, %v601
        %v603 = vsub.f32 1.0, %v602
        %v604 = vmul.f32 %v601, %v603
        %v605 = vadd.f32 %v601, %v604
        %vm606 = vweird.f32 %v601
        %v607 = vsel %vm606, %v601, %v605
        %v608 = vmul.f32 %v600, %v607
        %v609 = vsub.f32 %v596, %v608
        %v610 = vmul.f32 %v609, %v609
        %v611 = vsel %vm597, %v610, 0.0
        %612 = vadd.xlane.f32.xlu0 %v611
        %v613 = vpop.xlane.xlu0 %612
        %v614 = vmul.f32 %v613, %v607
        %v615 = vadd.f32 %v614, 1e-05
        %v616 = vrsqrt.pop %v615
        %v617 = vmul.f32 %v616, %v615
        %v618 = vmul.f32 %v617, %v616
        %v619 = vmul.f32 0.5, %v618
        %v620 = vsub.f32 1.5, %v619
        %v621 = vmul.f32 %v616, %v620
        %vm622 = vweird.f32 %v615
        %vm623 = vweird.f32 %v616
        %vm624 = vmor %vm622, %vm623
        %v625 = vsel %vm624, %v616, %v621
        %v626 = vmul.f32 %v609, %v625
        %v627 = vrot.slane %v352, 5
        %v629 = vmul.f32 %v626, %v627
        %v630 = vrot.slane %v352, 6
        %v632 = vadd.f32 %v629, %v630
        %v633 = vld [vmem:[%s6] sm:$0xff]
        %v634 = vld [vmem:[%s6 + $0x8] sm:$0xff]
        %v635 = vld [vmem:[%s6 + $0x10] sm:$0xff]
        %v636 = vld [vmem:[%s6 + $0x18] sm:$0xff]
        %v637 = vld [vmem:[%s6 + $0x20] sm:$0xff]
        %v638 = vld [vmem:[%s6 + $0x28] sm:$0xff]
        %v639 = vld [vmem:[%s6 + $0x30] sm:$0xff]
        %v640 = vld [vmem:[%s6 + $0x38] sm:$0xff]
        %v641 = vld [vmem:[%s6 + $0x40] sm:$0xff]
        %v642 = vld [vmem:[%s6 + $0x48] sm:$0xff]
        %v643 = vld [vmem:[%s6 + $0x50] sm:$0xff]
        %v644 = vld [vmem:[%s6 + $0x58] sm:$0xff]
        %v645 = vld [vmem:[%s6 + $0x60] sm:$0xff]
        %v646 = vld [vmem:[%s6 + $0x68] sm:$0xff]
        %v647 = vld [vmem:[%s6 + $0x70] sm:$0xff]
        %v648 = vld [vmem:[%s6 + $0x78] sm:$0xff]
        %v650 = vrot.slane %v632, 7
        %v654 = vrot.slane %v353, 6
        %v655 = vrot.slane %v354, 6
        %v656 = vrot.slane %v355, 6
        %v660 = vsel %vm410, %v650, 0
        %662 = vmatpush.msra.mxu0 0.0
        %663 = vmatpush.msra.mxu0 0.0
        %664 = vmatpush.msra.mxu0 0.0
        %665 = vmatpush.msra.mxu0 0.0
        %666 = vmatpush.msra.mxu0 0.0
        %667 = vmatpush.msra.mxu0 0.0
        %668 = vmatpush.msra.mxu0 0.0
        %669 = vmatpush.msra.mxu0 0.0
        %670 = vmatpush.msra.mxu0 0.0
        %671 = vmatpush.msra.mxu0 0.0
        %672 = vmatpush.msra.mxu0 0.0
        %673 = vmatpush.msra.mxu0 0.0
        %674 = vmatpush.msra.mxu0 %v645
        %675 = vmatpush.msra.mxu0 %v641
        %676 = vmatpush.msra.mxu0 %v637
        %677 = vmatpush.msra.mxu0 %v633
        %678 = vmatmul.f32.gmra.mxu0 %v660
        %v679 = vpop.f32.mrf.mxu0
        %v680 = vadd.f32 %v630, %v679
        %681 = vdwg.mxu0
        %682 = vmatpush.msra.mxu0 0.0
        %683 = vmatpush.msra.mxu0 0.0
        %684 = vmatpush.msra.mxu0 0.0
        %685 = vmatpush.msra.mxu0 0.0
        %686 = vmatpush.msra.mxu0 0.0
        %687 = vmatpush.msra.mxu0 0.0
        %688 = vmatpush.msra.mxu0 0.0
        %689 = vmatpush.msra.mxu0 0.0
        %690 = vmatpush.msra.mxu0 0.0
        %691 = vmatpush.msra.mxu0 0.0
        %692 = vmatpush.msra.mxu0 0.0
        %693 = vmatpush.msra.mxu0 0.0
        %694 = vmatpush.msra.mxu0 %v646
        %695 = vmatpush.msra.mxu0 %v642
        %696 = vmatpush.msra.mxu0 %v638
        %697 = vmatpush.msra.mxu0 %v634
        %698 = vmatmul.f32.gmra.mxu0 %v660
        %v699 = vpop.f32.mrf.mxu0
        %v700 = vadd.f32 %v654, %v699
        %701 = vdwg.mxu0
        %702 = vmatpush.msra.mxu0 0.0
        %703 = vmatpush.msra.mxu0 0.0
        %704 = vmatpush.msra.mxu0 0.0
        %705 = vmatpush.msra.mxu0 0.0
        %706 = vmatpush.msra.mxu0 0.0
        %707 = vmatpush.msra.mxu0 0.0
        %708 = vmatpush.msra.mxu0 0.0
        %709 = vmatpush.msra.mxu0 0.0
        %710 = vmatpush.msra.mxu0 0.0
        %711 = vmatpush.msra.mxu0 0.0
        %712 = vmatpush.msra.mxu0 0.0
        %713 = vmatpush.msra.mxu0 0.0
        %714 = vmatpush.msra.mxu0 %v647
        %715 = vmatpush.msra.mxu0 %v643
        %716 = vmatpush.msra.mxu0 %v639
        %717 = vmatpush.msra.mxu0 %v635
        %718 = vmatmul.f32.gmra.mxu0 %v660
        %v719 = vpop.f32.mrf.mxu0
        %v720 = vadd.f32 %v655, %v719
        %721 = vdwg.mxu0
        %722 = vmatpush.msra.mxu0 0.0
        %723 = vmatpush.msra.mxu0 0.0
        %724 = vmatpush.msra.mxu0 0.0
        %725 = vmatpush.msra.mxu0 0.0
        %726 = vmatpush.msra.mxu0 0.0
        %727 = vmatpush.msra.mxu0 0.0
        %728 = vmatpush.msra.mxu0 0.0
        %729 = vmatpush.msra.mxu0 0.0
        %730 = vmatpush.msra.mxu0 0.0
        %731 = vmatpush.msra.mxu0 0.0
        %732 = vmatpush.msra.mxu0 0.0
        %733 = vmatpush.msra.mxu0 0.0
        %734 = vmatpush.msra.mxu0 %v648
        %735 = vmatpush.msra.mxu0 %v644
        %736 = vmatpush.msra.mxu0 %v640
        %737 = vmatpush.msra.mxu0 %v636
        %738 = vmatmul.f32.gmra.mxu0 %v660
        %v739 = vpop.f32.mrf.mxu0
        %v740 = vadd.f32 %v656, %v739
        %741 = vdwg.mxu0
        %v742 = vmax.f32 %v680, 0.0
        %v743 = vmax.f32 %v700, 0.0
        %v744 = vmax.f32 %v720, 0.0
        %v745 = vmax.f32 %v740, 0.0
        %v746 = vld [vmem:[%s7] sm:$0xff]
        %v747 = vld [vmem:[%s7 + $0x8] sm:$0xff]
        %v748 = vld [vmem:[%s7 + $0x10] sm:$0xff]
        %v749 = vld [vmem:[%s7 + $0x18] sm:$0xff]
        %v750 = vld [vmem:[%s7 + $0x20] sm:$0xff]
        %v751 = vld [vmem:[%s7 + $0x28] sm:$0xff]
        %v752 = vld [vmem:[%s7 + $0x30] sm:$0xff]
        %v753 = vld [vmem:[%s7 + $0x38] sm:$0xff]
        %v754 = vld [vmem:[%s7 + $0x40] sm:$0xff]
        %v755 = vld [vmem:[%s7 + $0x48] sm:$0xff]
        %v756 = vld [vmem:[%s7 + $0x50] sm:$0xff]
        %v757 = vld [vmem:[%s7 + $0x58] sm:$0xff]
        %v758 = vld [vmem:[%s7 + $0x60] sm:$0xff]
        %v759 = vld [vmem:[%s7 + $0x68] sm:$0xff]
        %v760 = vld [vmem:[%s7 + $0x70] sm:$0xff]
        %v761 = vld [vmem:[%s7 + $0x78] sm:$0xff]
        %v762 = vld [vmem:[%s7 + $0x80] sm:$0xff]
        %v763 = vld [vmem:[%s7 + $0x88] sm:$0xff]
        %v764 = vld [vmem:[%s7 + $0x90] sm:$0xff]
        %v765 = vld [vmem:[%s7 + $0x98] sm:$0xff]
        %v766 = vld [vmem:[%s7 + $0xa0] sm:$0xff]
        %v767 = vld [vmem:[%s7 + $0xa8] sm:$0xff]
        %v768 = vld [vmem:[%s7 + $0xb0] sm:$0xff]
        %v769 = vld [vmem:[%s7 + $0xb8] sm:$0xff]
        %v770 = vld [vmem:[%s7 + $0xc0] sm:$0xff]
        %v771 = vld [vmem:[%s7 + $0xc8] sm:$0xff]
        %v772 = vld [vmem:[%s7 + $0xd0] sm:$0xff]
        %v773 = vld [vmem:[%s7 + $0xd8] sm:$0xff]
        %v774 = vld [vmem:[%s7 + $0xe0] sm:$0xff]
        %v775 = vld [vmem:[%s7 + $0xe8] sm:$0xff]
        %v776 = vld [vmem:[%s7 + $0xf0] sm:$0xff]
        %v777 = vld [vmem:[%s7 + $0xf8] sm:$0xff]
        %v778 = vld [vmem:[%s7 + $0x100] sm:$0xff]
        %v779 = vld [vmem:[%s7 + $0x108] sm:$0xff]
        %v780 = vld [vmem:[%s7 + $0x110] sm:$0xff]
        %v781 = vld [vmem:[%s7 + $0x118] sm:$0xff]
        %v782 = vld [vmem:[%s7 + $0x120] sm:$0xff]
        %v783 = vld [vmem:[%s7 + $0x128] sm:$0xff]
        %v784 = vld [vmem:[%s7 + $0x130] sm:$0xff]
        %v785 = vld [vmem:[%s7 + $0x138] sm:$0xff]
        %v786 = vld [vmem:[%s7 + $0x140] sm:$0xff]
        %v787 = vld [vmem:[%s7 + $0x148] sm:$0xff]
        %v788 = vld [vmem:[%s7 + $0x150] sm:$0xff]
        %v789 = vld [vmem:[%s7 + $0x158] sm:$0xff]
        %v790 = vld [vmem:[%s7 + $0x160] sm:$0xff]
        %v791 = vld [vmem:[%s7 + $0x168] sm:$0xff]
        %v792 = vld [vmem:[%s7 + $0x170] sm:$0xff]
        %v793 = vld [vmem:[%s7 + $0x178] sm:$0xff]
        %v794 = vld [vmem:[%s7 + $0x180] sm:$0xff]
        %v795 = vld [vmem:[%s7 + $0x188] sm:$0xff]
        %v796 = vld [vmem:[%s7 + $0x190] sm:$0xff]
        %v797 = vld [vmem:[%s7 + $0x198] sm:$0xff]
        %v798 = vld [vmem:[%s7 + $0x1a0] sm:$0xff]
        %v799 = vld [vmem:[%s7 + $0x1a8] sm:$0xff]
        %v800 = vld [vmem:[%s7 + $0x1b0] sm:$0xff]
        %v801 = vld [vmem:[%s7 + $0x1b8] sm:$0xff]
        %v802 = vld [vmem:[%s7 + $0x1c0] sm:$0xff]
        %v803 = vld [vmem:[%s7 + $0x1c8] sm:$0xff]
        %v804 = vld [vmem:[%s7 + $0x1d0] sm:$0xff]
        %v805 = vld [vmem:[%s7 + $0x1d8] sm:$0xff]
        %v806 = vld [vmem:[%s7 + $0x1e0] sm:$0xff]
        %v807 = vld [vmem:[%s7 + $0x1e8] sm:$0xff]
        %v808 = vld [vmem:[%s7 + $0x1f0] sm:$0xff]
        %v809 = vld [vmem:[%s7 + $0x1f8] sm:$0xff]
        %v810 = vrot.slane %v352, 7
        %812 = vmatpush.msra.mxu0 %v761
        %813 = vmatpush.msra.mxu0 %v760
        %814 = vmatpush.msra.mxu0 %v759
        %815 = vmatpush.msra.mxu0 %v758
        %816 = vmatpush.msra.mxu0 %v757
        %817 = vmatpush.msra.mxu0 %v756
        %818 = vmatpush.msra.mxu0 %v755
        %819 = vmatpush.msra.mxu0 %v754
        %820 = vmatpush.msra.mxu0 %v753
        %821 = vmatpush.msra.mxu0 %v752
        %822 = vmatpush.msra.mxu0 %v751
        %823 = vmatpush.msra.mxu0 %v750
        %824 = vmatpush.msra.mxu0 %v749
        %825 = vmatpush.msra.mxu0 %v748
        %826 = vmatpush.msra.mxu0 %v747
        %827 = vmatpush.msra.mxu0 %v746
        %828 = vmatmul.f32.gmra.mxu0 %v742
        %v829 = vpop.f32.mrf.mxu0
        %v830 = vadd.f32 %v810, %v829
        %831 = vdwg.mxu0
        %832 = vmatpush.msra.mxu0 %v777
        %833 = vmatpush.msra.mxu0 %v776
        %834 = vmatpush.msra.mxu0 %v775
        %835 = vmatpush.msra.mxu0 %v774
        %836 = vmatpush.msra.mxu0 %v773
        %837 = vmatpush.msra.mxu0 %v772
        %838 = vmatpush.msra.mxu0 %v771
        %839 = vmatpush.msra.mxu0 %v770
        %840 = vmatpush.msra.mxu0 %v769
        %841 = vmatpush.msra.mxu0 %v768
        %842 = vmatpush.msra.mxu0 %v767
        %843 = vmatpush.msra.mxu0 %v766
        %844 = vmatpush.msra.mxu0 %v765
        %845 = vmatpush.msra.mxu0 %v764
        %846 = vmatpush.msra.mxu0 %v763
        %847 = vmatpush.msra.mxu0 %v762
        %848 = vmatmul.f32.gmra.mxu0 %v743
        %v849 = vpop.f32.mrf.mxu0
        %v850 = vadd.f32 %v830, %v849
        %851 = vdwg.mxu0
        %852 = vmatpush.msra.mxu0 %v793
        %853 = vmatpush.msra.mxu0 %v792
        %854 = vmatpush.msra.mxu0 %v791
        %855 = vmatpush.msra.mxu0 %v790
        %856 = vmatpush.msra.mxu0 %v789
        %857 = vmatpush.msra.mxu0 %v788
        %858 = vmatpush.msra.mxu0 %v787
        %859 = vmatpush.msra.mxu0 %v786
        %860 = vmatpush.msra.mxu0 %v785
        %861 = vmatpush.msra.mxu0 %v784
        %862 = vmatpush.msra.mxu0 %v783
        %863 = vmatpush.msra.mxu0 %v782
        %864 = vmatpush.msra.mxu0 %v781
        %865 = vmatpush.msra.mxu0 %v780
        %866 = vmatpush.msra.mxu0 %v779
        %867 = vmatpush.msra.mxu0 %v778
        %868 = vmatmul.f32.gmra.mxu0 %v744
        %v869 = vpop.f32.mrf.mxu0
        %v870 = vadd.f32 %v850, %v869
        %871 = vdwg.mxu0
        %872 = vmatpush.msra.mxu0 %v809
        %873 = vmatpush.msra.mxu0 %v808
        %874 = vmatpush.msra.mxu0 %v807
        %875 = vmatpush.msra.mxu0 %v806
        %876 = vmatpush.msra.mxu0 %v805
        %877 = vmatpush.msra.mxu0 %v804
        %878 = vmatpush.msra.mxu0 %v803
        %879 = vmatpush.msra.mxu0 %v802
        %880 = vmatpush.msra.mxu0 %v801
        %881 = vmatpush.msra.mxu0 %v800
        %882 = vmatpush.msra.mxu0 %v799
        %883 = vmatpush.msra.mxu0 %v798
        %884 = vmatpush.msra.mxu0 %v797
        %885 = vmatpush.msra.mxu0 %v796
        %886 = vmatpush.msra.mxu0 %v795
        %887 = vmatpush.msra.mxu0 %v794
        %888 = vmatmul.f32.gmra.mxu0 %v745
        %v889 = vpop.f32.mrf.mxu0
        %v890 = vadd.f32 %v870, %v889
        %891 = vdwg.mxu0
        %v893 = vrot.slane %v890, 1
        %v895 = vadd.f32 %v632, %v893
        %v896 = vsel %vm597, %v895, 0.0
        %897 = vadd.xlane.f32.xlu0 %v896
        %v898 = vpop.xlane.xlu0 %897
        %v899 = vmul.f32 %v898, %v607
        %v900 = vsub.f32 %v895, %v899
        %v901 = vmul.f32 %v900, %v900
        %v902 = vsel %vm597, %v901, 0.0
        %903 = vadd.xlane.f32.xlu0 %v902
        %v904 = vpop.xlane.xlu0 %903
        %v905 = vmul.f32 %v904, %v607
        %v906 = vadd.f32 %v905, 1e-05
        %v907 = vrsqrt.pop %v906
        %v908 = vmul.f32 %v907, %v906
        %v909 = vmul.f32 %v908, %v907
        %v910 = vmul.f32 0.5, %v909
        %v911 = vsub.f32 1.5, %v910
        %v912 = vmul.f32 %v907, %v911
        %vm913 = vweird.f32 %v906
        %vm914 = vweird.f32 %v907
        %vm915 = vmor %vm913, %vm914
        %v916 = vsel %vm915, %v907, %v912
        %v917 = vmul.f32 %v900, %v916
        %v919 = vrot.slane %v356, 1
        %v921 = vmul.f32 %v917, %v919
        %v922 = vrot.slane %v356, 2
        %v924 = vadd.f32 %v921, %v922
        %v925 = vld [vmem:[%s8] sm:$0xff]
        %v926 = vld [vmem:[%s8 + $0x8] sm:$0xff]
        %v927 = vld [vmem:[%s8 + $0x10] sm:$0xff]
        %v928 = vld [vmem:[%s8 + $0x18] sm:$0xff]
        %v930 = vrot.slane %v924, 7
        %v931 = vsel %vm410, %v930, 0
        %933 = vmatpush.msra.mxu0 0.0
        %934 = vmatpush.msra.mxu0 0.0
        %935 = vmatpush.msra.mxu0 0.0
        %936 = vmatpush.msra.mxu0 0.0
        %937 = vmatpush.msra.mxu0 0.0
        %938 = vmatpush.msra.mxu0 0.0
        %939 = vmatpush.msra.mxu0 0.0
        %940 = vmatpush.msra.mxu0 0.0
        %941 = vmatpush.msra.mxu0 0.0
        %942 = vmatpush.msra.mxu0 0.0
        %943 = vmatpush.msra.mxu0 0.0
        %944 = vmatpush.msra.mxu0 0.0
        %945 = vmatpush.msra.mxu0 %v928
        %946 = vmatpush.msra.mxu0 %v927
        %947 = vmatpush.msra.mxu0 %v926
        %948 = vmatpush.msra.mxu0 %v925
        %949 = vmatmul.f32.gmra.mxu0 %v931
        %v950 = vpop.f32.mrf.mxu0
        %v951 = vadd.f32 %v922, %v950
        %952 = vdwg.mxu0
        %953 = vst [vmem:[%s347] sm:$0x1] %v951
        %s954 = sand.u32 %s247, 1
        %s955 = scalar_lea.sflag [#allocation3], %s954
        %s956 = sand.u32 %s247, 1
        %s957 = scalar_lea.vmem [#allocation2], %s956
        // Predicated region
        $region61: #{tpu_custom_call.1} parent=59 // pred_check
          %p958 = pneg %p257
        $region62: #{tpu_custom_call.1} parent=59 // pred_check_branch
          %960 = sbr.rel (%p958) target = $region64
        $region63: #{tpu_custom_call.1} parent=59 // pred_region
          %962 = vsyncadd %s955, 0
          %s963 = scalar_lea.hbm %s10, %s24
          %s965 = sshll.u32 %s957, 4
          %s966 = int_to_ptr.vmem [resolvable:$true] %s965
          %s967 = sshll.u32 %s963, 4
          %s968 = int_to_ptr.hbm [resolvable:$true] %s967
          %970 = dma.vmem_to_hbm [thread:$0]  %s966, 16, %s968, %s955
        $region64: #{tpu_custom_call.1} parent=59 // pred_fallthru
          _
      $region60: #{tpu_custom_call.1} parent=5 // pred_fallthru
        _
      %p971 = scmp.le.s32.totalorder 2, %s19
      // Predicated region
      $region65: #{tpu_custom_call.1} parent=5 // pred_check
        %p972 = pneg %p971
      $region66: #{tpu_custom_call.1} parent=5 // pred_check_branch
        %974 = sbr.rel (%p972) target = $region68
      $region67: #{tpu_custom_call.1} parent=5 // pred_region
        %s975 = ssub.s32 %s19, 2
        // Predicated region
        $region69: #{tpu_custom_call.1} parent=67 // pred_check
          %p976 = pneg %p263
        $region70: #{tpu_custom_call.1} parent=67 // pred_check_branch
          %978 = sbr.rel (%p976) target = $region72
        $region71: #{tpu_custom_call.1} parent=67 // pred_region
          %s979 = sand.u32 %s248, 1
          %s980 = scalar_lea.sflag [#allocation3], %s979
          %s981 = sand.u32 %s248, 1
          %s982 = scalar_lea.vmem [#allocation2], %s981
          %984 = dma.done %s980, 16
        $region72: #{tpu_custom_call.1} parent=67 // pred_fallthru
          _
      $region68: #{tpu_custom_call.1} parent=5 // pred_fallthru
        _
    $region6: #{tpu_custom_call.1} parent=1 // loop_footer
      %s23 = sadd.s32 1, %s19
    $region7: #{tpu_custom_call.1} parent=1 // loop_footer_branch
      %18 = sbr.rel target = $region3
    $region8: #{tpu_custom_call.1} parent=1 // loop_exit
      _
    %985 = vsyncpa [#allocation3], 1
    %s986 = scalar_lea.sflag [#allocation3], 1
    %987 = vsyncpa %s986, 1

</llo_original>
